<compile_context>
chip_gen: v6e
topology: v6e:2x2x1
jax: 0.10.0
libtpu: 0.0.40
codegen_flags: <defaults>
</compile_context>

<pallas_src>
import jax
import jax.numpy as jnp
from jax import lax
from jax.experimental import pallas as pl
from jax.experimental.pallas import tpu as pltpu


def _round_up(n, m):
    return ((n + m - 1) // m) * m


def _make_kernel(nl, nl_p):
    """Build the fused MLP kernel for hidden width nl (nl_p = nl rounded to 8)."""

    def kernel(x_ref, w1_ref, w23_ref, bpack_ref, o_ref):
        x = x_ref[...]                              # (tb, nx) batch rows
        w1 = w1_ref[...]                            # (nl, nx)

        # Static, sublane-aligned slices of the packed resident operands.
        w2 = w23_ref[0:nl, :]                       # (nl, nl)
        w3 = w23_ref[nl_p:nl_p + nl, :]             # (nl, nl)
        b1 = bpack_ref[0:nl, :]                     # (nl, 1)
        b2 = bpack_ref[nl_p:nl_p + nl, :]           # (nl, 1)
        b3 = bpack_ref[2 * nl_p:2 * nl_p + nl, :]   # (nl, 1)
        w4 = bpack_ref[3 * nl_p:3 * nl_p + nl, :]   # (nl, 1)  last-layer column
        b4 = bpack_ref[4 * nl_p:4 * nl_p + 1, :]    # (1, 1)

        # Layer 1: contract over nx (rhs dim 1) -> (nl, tb); batch on lanes.
        h = lax.dot_general(w1, x, (((1,), (1,)), ((), ())),
                            preferred_element_type=jnp.float32) + b1
        h = jnp.maximum(h, 0.2 * h)                 # LeakyReLU(0.2)

        h = jnp.dot(w2, h, preferred_element_type=jnp.float32) + b2
        h = jnp.maximum(h, 0.2 * h)

        h = jnp.dot(w3, h, preferred_element_type=jnp.float32) + b3
        h = jnp.maximum(h, 0.2 * h)

        # Final nl -> 1 layer: VPU multiply + cross-sublane reduce.
        out = jnp.sum(h * w4, axis=0, keepdims=True) + b4   # (1, tb)
        o_ref[...] = out.astype(o_ref.dtype)

    return kernel


def _pick_tb(B):
    """Large tiles to amortize per-step overhead; keep >=4 steps for big B (v7x)."""
    b128 = _round_up(B, 128)
    tb = max(512, _round_up(max(b128 // 4, 1), 128))   # aim for ~4 grid steps
    tb = min(4096, tb)                                 # cap the tile size
    tb = min(tb, b128)                                 # never exceed the batch
    return max(128, tb)


def d_mlp8_forward(x, params, *, tb=None):
    """x: (B, nx) f32. params in PyTorch layout (W:(out,in), b:(out,)). Returns (B,)."""
    (w1, b1), (w2, b2), (w3, b3), (w4, b4) = params
    B, nx = x.shape
    nl = w1.shape[0]
    nl_p = _round_up(nl, 8)          # sublane-aligned segment size

    if tb is None:
        tb = _pick_tb(B)
    else:
        tb = max(128, _round_up(tb, 128))

    # Pack [W2; W3] (8-row aligned segments).
    def _pad_rows(a, rows):
        pad = rows - a.shape[0]
        return a if pad == 0 else jnp.pad(a, ((0, pad), (0, 0)))

    w23 = jnp.concatenate([_pad_rows(w2, nl_p), _pad_rows(w3, nl_p)], axis=0)  # (2*nl_p, nl)

    # Pack [b1; b2; b3; w4; b4] into one column slab (8-row aligned segments).
    bpack = jnp.zeros((4 * nl_p + 8, 1), jnp.float32)
    bpack = bpack.at[0:nl, 0].set(b1)
    bpack = bpack.at[nl_p:nl_p + nl, 0].set(b2)
    bpack = bpack.at[2 * nl_p:2 * nl_p + nl, 0].set(b3)
    bpack = bpack.at[3 * nl_p:3 * nl_p + nl, 0].set(w4.reshape(-1))
    bpack = bpack.at[4 * nl_p, 0].set(jnp.reshape(b4, ()))

    grid = (pl.cdiv(B, tb),)

    flops = 2 * B * (nx * nl + 2 * nl * nl + nl)
    bytes_accessed = 4 * (B * nx + B + nx * nl + 2 * nl_p * nl + 4 * nl_p + 8)

    out = pl.pallas_call(
        _make_kernel(nl, nl_p),
        out_shape=jax.ShapeDtypeStruct((1, B), jnp.float32),
        grid=grid,
        in_specs=[
            pl.BlockSpec((tb, nx), lambda i: (i, 0)),             # x tile (pipelined)
            pl.BlockSpec((nl, nx), lambda i: (0, 0)),             # W1 (resident)
            pl.BlockSpec((2 * nl_p, nl), lambda i: (0, 0)),       # [W2; W3] (resident)
            pl.BlockSpec((4 * nl_p + 8, 1), lambda i: (0, 0)),    # [b1;b2;b3;w4;b4]
        ],
        out_specs=pl.BlockSpec((1, tb), lambda i: (0, i)),
        compiler_params=pltpu.CompilerParams(
            dimension_semantics=("parallel",)),
        cost_estimate=pl.CostEstimate(
            flops=flops, transcendentals=0, bytes_accessed=bytes_accessed),
    )(x, w1, w23, bpack)

    # (1, B) -> (B,); matches PyTorch `out.squeeze()` for (B, 1) -> (B,).
    return jnp.squeeze(out[0])


def init_params(key, nx, nl):
    """PyTorch-style uniform init; weights stored (out_features, in_features)."""
    def linear(k, fan_in, fan_out):
        kw, kb = jax.random.split(k)
        bound = 1.0 / jnp.sqrt(fan_in)
        w = jax.random.uniform(kw, (fan_out, fan_in), jnp.float32, -bound, bound)
        b = jax.random.uniform(kb, (fan_out,), jnp.float32, -bound, bound)
        return w, b

    k1, k2, k3, k4 = jax.random.split(key, 4)
    return (
        linear(k1, nx, nl),
        linear(k2, nl, nl),
        linear(k3, nl, nl),
        linear(k4, nl, 1),
    )


def reference_forward(x, params):
    """Plain-JAX reference of the PyTorch module (batch-major)."""
    h = x
    for idx, (w, b) in enumerate(params):
        h = h @ w.T + b
        if idx < 3:
            h = jnp.where(h > 0, h, 0.2 * h)
    return jnp.squeeze(h)


if __name__ == "__main__":
    key = jax.random.PRNGKey(0)
    k_params, k_x = jax.random.split(key)

    nx, nl = 16, 32
    params = init_params(k_params, nx, nl)

    # Even batch (exact tiles) and odd batch (partial last block, no pad path).
    for B in (512, 333):
        kx = jax.random.fold_in(k_x, B)
        x = jax.random.normal(kx, (B, nx), jnp.float32)

        out = jax.block_until_ready(d_mlp8_forward(x, params))
        ref = reference_forward(x, params)

        assert out.shape == (B,), f"unexpected output shape {out.shape} for B={B}"
        assert jnp.allclose(out, ref, atol=1e-3, rtol=1e-3), f"mismatch vs reference at B={B}"

    print("KERNEL_OK")
</pallas_src>

<mosaic_0001>
module attributes {stable_mosaic.version = 11 : i64} {
  func.func @kernel(%arg0: i32, %arg1: memref<512x16xf32, #tpu.memory_space<vmem>>, %arg2: memref<32x16xf32, #tpu.memory_space<vmem>>, %arg3: memref<64x32xf32, #tpu.memory_space<vmem>>, %arg4: memref<136x1xf32, #tpu.memory_space<vmem>>, %arg5: memref<1x512xf32, #tpu.memory_space<vmem>>) attributes {dimension_semantics = [#tpu.dimension_semantics<parallel>], iteration_bounds = array<i64: 1>, scalar_prefetch = 0 : i64, scratch_operands = 0 : i64, tpu.core_type = #tpu.core_type<tc>, window_params = [{transform_indices = @transform_0, window_bounds = array<i64: 512, 16>}, {pipeline_mode = #tpu.pipeline_mode<synchronous>, transform_indices = @transform_1, window_bounds = array<i64: 32, 16>}, {pipeline_mode = #tpu.pipeline_mode<synchronous>, transform_indices = @transform_2, window_bounds = array<i64: 64, 32>}, {pipeline_mode = #tpu.pipeline_mode<synchronous>, transform_indices = @transform_3, window_bounds = array<i64: 136, 1>}, {transform_indices = @transform_4, window_bounds = array<i64: 1, 512>}]} {
    %c0 = arith.constant 0 : index
    %c0_0 = arith.constant 0 : index
    %0 = vector.load %arg1[%c0, %c0_0] : memref<512x16xf32, #tpu.memory_space<vmem>>, vector<512x16xf32>
    %c0_1 = arith.constant 0 : index
    %c0_2 = arith.constant 0 : index
    %1 = vector.load %arg2[%c0_1, %c0_2] : memref<32x16xf32, #tpu.memory_space<vmem>>, vector<32x16xf32>
    %c0_3 = arith.constant 0 : index
    %c0_4 = arith.constant 0 : index
    %2 = vector.load %arg3[%c0_3, %c0_4] : memref<64x32xf32, #tpu.memory_space<vmem>>, vector<32x32xf32>
    %c32 = arith.constant 32 : index
    %c0_5 = arith.constant 0 : index
    %3 = vector.load %arg3[%c32, %c0_5] : memref<64x32xf32, #tpu.memory_space<vmem>>, vector<32x32xf32>
    %c0_6 = arith.constant 0 : index
    %c0_7 = arith.constant 0 : index
    %4 = vector.load %arg4[%c0_6, %c0_7] : memref<136x1xf32, #tpu.memory_space<vmem>>, vector<32x1xf32>
    %c32_8 = arith.constant 32 : index
    %c0_9 = arith.constant 0 : index
    %5 = vector.load %arg4[%c32_8, %c0_9] : memref<136x1xf32, #tpu.memory_space<vmem>>, vector<32x1xf32>
    %c64 = arith.constant 64 : index
    %c0_10 = arith.constant 0 : index
    %6 = vector.load %arg4[%c64, %c0_10] : memref<136x1xf32, #tpu.memory_space<vmem>>, vector<32x1xf32>
    %c96 = arith.constant 96 : index
    %c0_11 = arith.constant 0 : index
    %7 = vector.load %arg4[%c96, %c0_11] : memref<136x1xf32, #tpu.memory_space<vmem>>, vector<32x1xf32>
    %c128 = arith.constant 128 : index
    %c0_12 = arith.constant 0 : index
    %8 = vector.load %arg4[%c128, %c0_12] : memref<136x1xf32, #tpu.memory_space<vmem>>, vector<1x1xf32>
    %cst = arith.constant dense<0.000000e+00> : vector<32x512xf32>
    %9 = tpu.matmul %1, %0, %cst {dimension_numbers = #tpu.dot_dimension_numbers<[1], [1], [0], [0], [0, 0, 1, 0], [], []>} : vector<32x16xf32>, vector<512x16xf32>, vector<32x512xf32> -> vector<32x512xf32>
    %10 = vector.broadcast %4 : vector<32x1xf32> to vector<32x512xf32>
    %11 = arith.addf %9, %10 : vector<32x512xf32>
    %cst_13 = arith.constant 2.000000e-01 : f32
    %12 = vector.broadcast %cst_13 : f32 to vector<32x512xf32>
    %13 = arith.mulf %12, %11 : vector<32x512xf32>
    %14 = arith.maximumf %11, %13 : vector<32x512xf32>
    %cst_14 = arith.constant dense<0.000000e+00> : vector<32x512xf32>
    %15 = tpu.matmul %2, %14, %cst_14 {dimension_numbers = #tpu.dot_dimension_numbers<[1], [0], [0], [1], [0, 0, 1, 1], [], []>} : vector<32x32xf32>, vector<32x512xf32>, vector<32x512xf32> -> vector<32x512xf32>
    %16 = vector.broadcast %5 : vector<32x1xf32> to vector<32x512xf32>
    %17 = arith.addf %15, %16 : vector<32x512xf32>
    %cst_15 = arith.constant 2.000000e-01 : f32
    %18 = vector.broadcast %cst_15 : f32 to vector<32x512xf32>
    %19 = arith.mulf %18, %17 : vector<32x512xf32>
    %20 = arith.maximumf %17, %19 : vector<32x512xf32>
    %cst_16 = arith.constant dense<0.000000e+00> : vector<32x512xf32>
    %21 = tpu.matmul %3, %20, %cst_16 {dimension_numbers = #tpu.dot_dimension_numbers<[1], [0], [0], [1], [0, 0, 1, 1], [], []>} : vector<32x32xf32>, vector<32x512xf32>, vector<32x512xf32> -> vector<32x512xf32>
    %22 = vector.broadcast %6 : vector<32x1xf32> to vector<32x512xf32>
    %23 = arith.addf %21, %22 : vector<32x512xf32>
    %cst_17 = arith.constant 2.000000e-01 : f32
    %24 = vector.broadcast %cst_17 : f32 to vector<32x512xf32>
    %25 = arith.mulf %24, %23 : vector<32x512xf32>
    %26 = arith.maximumf %23, %25 : vector<32x512xf32>
    %27 = vector.broadcast %7 : vector<32x1xf32> to vector<32x512xf32>
    %28 = arith.mulf %26, %27 : vector<32x512xf32>
    %cst_18 = arith.constant dense<0.000000e+00> : vector<512xf32>
    %29 = vector.multi_reduction <add>, %28, %cst_18 [0] : vector<32x512xf32> to vector<512xf32>
    %30 = vector.shape_cast %29 : vector<512xf32> to vector<1x512xf32>
    %31 = vector.broadcast %8 : vector<1x1xf32> to vector<1x512xf32>
    %32 = arith.addf %30, %31 : vector<1x512xf32>
    %c0_19 = arith.constant 0 : index
    %c0_20 = arith.constant 0 : index
    %33 = vector.load %arg5[%c0_19, %c0_20] : memref<1x512xf32, #tpu.memory_space<vmem>>, vector<1x512xf32>
    tpu.vector_store %arg5[%c0_19, %c0_20], %32 {strides = array<i32>} : memref<1x512xf32, #tpu.memory_space<vmem>>, vector<1x512xf32>,
    return
  }
  func.func @transform_0(%arg0: i32) -> (i32, i32) {
    %c0_i32 = arith.constant 0 : i32
    %c0_i32_0 = arith.constant 0 : i32
    return %arg0, %c0_i32 : i32, i32
  }
  func.func @transform_1(%arg0: i32) -> (i32, i32) {
    %c0_i32 = arith.constant 0 : i32
    %c0_i32_0 = arith.constant 0 : i32
    %c0_i32_1 = arith.constant 0 : i32
    return %c0_i32, %c0_i32_0 : i32, i32
  }
  func.func @transform_2(%arg0: i32) -> (i32, i32) {
    %c0_i32 = arith.constant 0 : i32
    %c0_i32_0 = arith.constant 0 : i32
    %c0_i32_1 = arith.constant 0 : i32
    return %c0_i32, %c0_i32_0 : i32, i32
  }
  func.func @transform_3(%arg0: i32) -> (i32, i32) {
    %c0_i32 = arith.constant 0 : i32
    %c0_i32_0 = arith.constant 0 : i32
    %c0_i32_1 = arith.constant 0 : i32
    return %c0_i32, %c0_i32_0 : i32, i32
  }
  func.func @transform_4(%arg0: i32) -> (i32, i32) {
    %c0_i32 = arith.constant 0 : i32
    %c0_i32_0 = arith.constant 0 : i32
    return %c0_i32, %arg0 : i32, i32
  }
}

</mosaic_0001>

<llo_original>
// kernel: tpu_custom_call.1
$region0: #{tpu_custom_call.1}
  #allocation0 [shape = 'u32[]', space=smem, size = 0x4, offset = 0x4, fixed_abs, tag = 'smem constant byte address 0x4 - core index']
  #allocation1 [shape = 'u32[144,128]{1,0:T(1,128)}', space=vmem, size = 0x12000, scoped, tag = 'internal scratch']
  %s0 = inlined_call_operand.vmem [shape: f32[512,16], index: 0, kind: input, shape index: {}]
  %s1 = inlined_call_operand.vmem [shape: f32[32,16], index: 1, kind: input, shape index: {}]
  %s2 = inlined_call_operand.vmem [shape: f32[64,32], index: 2, kind: input, shape index: {}]
  %s3 = inlined_call_operand.vmem [shape: f32[136,1], index: 3, kind: input, shape index: {}]
  %s4 = inlined_call_operand.hbm [shape: f32[1,512], index: 4, kind: output, shape index: {}]
  %s5 = sld [smem:[#allocation0]]
  $region26: #{tpu_custom_call.1} parent=0
    _
  %s7 = ssub.s32 1, %s5
  %s8 = scalar_select 0, %s7, %s5
  $region1: #{tpu_custom_call.1} parent=0
    #allocation2 [shape = 'u8[2048]{0}', space=vmem, size = 0x800, scoped, tag = 'output window, operand 0, single buffered']
    #allocation3 [shape = 's32[1]{0}', space=sflag, size = 0x4, scoped, tag = 'scoped memory for tpu_custom_call.1']
    %9 = vsyncpa [#allocation3], 0
    // Predicated region
    $region2: #{tpu_custom_call.1} parent=1 // pred_check
      _
    $region3: #{tpu_custom_call.1} parent=1 // pred_check_branch
      %11 = sbr.rel (0) target = $region5
    $region4: #{tpu_custom_call.1} parent=1 // pred_region
      _
    $region5: #{tpu_custom_call.1} parent=1 // pred_fallthru
      _
    // Predicated region
    $region6: #{tpu_custom_call.1} parent=1 // pred_check
      _
    $region7: #{tpu_custom_call.1} parent=1 // pred_check_branch
      %13 = sbr.rel (0) target = $region9
    $region8: #{tpu_custom_call.1} parent=1 // pred_region
      _
    $region9: #{tpu_custom_call.1} parent=1 // pred_fallthru
      _
    // Predicated region
    $region10: #{tpu_custom_call.1} parent=1 // pred_check
      _
    $region11: #{tpu_custom_call.1} parent=1 // pred_check_branch
      %15 = sbr.rel (0) target = $region13
    $region12: #{tpu_custom_call.1} parent=1 // pred_region
      _
    $region13: #{tpu_custom_call.1} parent=1 // pred_fallthru
      _
    // Predicated region
    $region14: #{tpu_custom_call.1} parent=1 // pred_check
      _
    $region15: #{tpu_custom_call.1} parent=1 // pred_check_branch
      %17 = sbr.rel (0) target = $region17
    $region16: #{tpu_custom_call.1} parent=1 // pred_region
      _
    $region17: #{tpu_custom_call.1} parent=1 // pred_fallthru
      _
    %v18 = vld [vmem:[%s0] sm:$0xff]
    %v19 = vld [vmem:[%s0 + $0x8] sm:$0xff]
    %v20 = vld [vmem:[%s0 + $0x10] sm:$0xff]
    %v21 = vld [vmem:[%s0 + $0x18] sm:$0xff]
    %v22 = vld [vmem:[%s0 + $0x20] sm:$0xff]
    %v23 = vld [vmem:[%s0 + $0x28] sm:$0xff]
    %v24 = vld [vmem:[%s0 + $0x30] sm:$0xff]
    %v25 = vld [vmem:[%s0 + $0x38] sm:$0xff]
    %v26 = vld [vmem:[%s0 + $0x40] sm:$0xff]
    %v27 = vld [vmem:[%s0 + $0x48] sm:$0xff]
    %v28 = vld [vmem:[%s0 + $0x50] sm:$0xff]
    %v29 = vld [vmem:[%s0 + $0x58] sm:$0xff]
    %v30 = vld [vmem:[%s0 + $0x60] sm:$0xff]
    %v31 = vld [vmem:[%s0 + $0x68] sm:$0xff]
    %v32 = vld [vmem:[%s0 + $0x70] sm:$0xff]
    %v33 = vld [vmem:[%s0 + $0x78] sm:$0xff]
    %v34 = vld [vmem:[%s0 + $0x80] sm:$0xff]
    %v35 = vld [vmem:[%s0 + $0x88] sm:$0xff]
    %v36 = vld [vmem:[%s0 + $0x90] sm:$0xff]
    %v37 = vld [vmem:[%s0 + $0x98] sm:$0xff]
    %v38 = vld [vmem:[%s0 + $0xa0] sm:$0xff]
    %v39 = vld [vmem:[%s0 + $0xa8] sm:$0xff]
    %v40 = vld [vmem:[%s0 + $0xb0] sm:$0xff]
    %v41 = vld [vmem:[%s0 + $0xb8] sm:$0xff]
    %v42 = vld [vmem:[%s0 + $0xc0] sm:$0xff]
    %v43 = vld [vmem:[%s0 + $0xc8] sm:$0xff]
    %v44 = vld [vmem:[%s0 + $0xd0] sm:$0xff]
    %v45 = vld [vmem:[%s0 + $0xd8] sm:$0xff]
    %v46 = vld [vmem:[%s0 + $0xe0] sm:$0xff]
    %v47 = vld [vmem:[%s0 + $0xe8] sm:$0xff]
    %v48 = vld [vmem:[%s0 + $0xf0] sm:$0xff]
    %v49 = vld [vmem:[%s0 + $0xf8] sm:$0xff]
    %v50 = vld [vmem:[%s0 + $0x100] sm:$0xff]
    %v51 = vld [vmem:[%s0 + $0x108] sm:$0xff]
    %v52 = vld [vmem:[%s0 + $0x110] sm:$0xff]
    %v53 = vld [vmem:[%s0 + $0x118] sm:$0xff]
    %v54 = vld [vmem:[%s0 + $0x120] sm:$0xff]
    %v55 = vld [vmem:[%s0 + $0x128] sm:$0xff]
    %v56 = vld [vmem:[%s0 + $0x130] sm:$0xff]
    %v57 = vld [vmem:[%s0 + $0x138] sm:$0xff]
    %v58 = vld [vmem:[%s0 + $0x140] sm:$0xff]
    %v59 = vld [vmem:[%s0 + $0x148] sm:$0xff]
    %v60 = vld [vmem:[%s0 + $0x150] sm:$0xff]
    %v61 = vld [vmem:[%s0 + $0x158] sm:$0xff]
    %v62 = vld [vmem:[%s0 + $0x160] sm:$0xff]
    %v63 = vld [vmem:[%s0 + $0x168] sm:$0xff]
    %v64 = vld [vmem:[%s0 + $0x170] sm:$0xff]
    %v65 = vld [vmem:[%s0 + $0x178] sm:$0xff]
    %v66 = vld [vmem:[%s0 + $0x180] sm:$0xff]
    %v67 = vld [vmem:[%s0 + $0x188] sm:$0xff]
    %v68 = vld [vmem:[%s0 + $0x190] sm:$0xff]
    %v69 = vld [vmem:[%s0 + $0x198] sm:$0xff]
    %v70 = vld [vmem:[%s0 + $0x1a0] sm:$0xff]
    %v71 = vld [vmem:[%s0 + $0x1a8] sm:$0xff]
    %v72 = vld [vmem:[%s0 + $0x1b0] sm:$0xff]
    %v73 = vld [vmem:[%s0 + $0x1b8] sm:$0xff]
    %v74 = vld [vmem:[%s0 + $0x1c0] sm:$0xff]
    %v75 = vld [vmem:[%s0 + $0x1c8] sm:$0xff]
    %v76 = vld [vmem:[%s0 + $0x1d0] sm:$0xff]
    %v77 = vld [vmem:[%s0 + $0x1d8] sm:$0xff]
    %v78 = vld [vmem:[%s0 + $0x1e0] sm:$0xff]
    %v79 = vld [vmem:[%s0 + $0x1e8] sm:$0xff]
    %v80 = vld [vmem:[%s0 + $0x1f0] sm:$0xff]
    %v81 = vld [vmem:[%s0 + $0x1f8] sm:$0xff]
    %v82 = vld [vmem:[%s1] sm:$0xff]
    %v83 = vld [vmem:[%s1 + $0x8] sm:$0xff]
    %v84 = vld [vmem:[%s1 + $0x10] sm:$0xff]
    %v85 = vld [vmem:[%s1 + $0x18] sm:$0xff]
    %v86 = vld [vmem:[%s2] sm:$0xff]
    %v87 = vld [vmem:[%s2 + $0x8] sm:$0xff]
    %v88 = vld [vmem:[%s2 + $0x10] sm:$0xff]
    %v89 = vld [vmem:[%s2 + $0x18] sm:$0xff]
    %v90 = vld [vmem:[%s2 + $0x20] sm:$0xff]
    %v91 = vld [vmem:[%s2 + $0x28] sm:$0xff]
    %v92 = vld [vmem:[%s2 + $0x30] sm:$0xff]
    %v93 = vld [vmem:[%s2 + $0x38] sm:$0xff]
    %v94 = vld [vmem:[%s3] sm:$0xff]
    %v95 = vld [vmem:[%s3 + $0x8] sm:$0xff]
    %v96 = vld [vmem:[%s3 + $0x10] sm:$0xff]
    %v97 = vld [vmem:[%s3 + $0x18] sm:$0xff]
    %v98 = vld [vmem:[%s3 + $0x20] sm:$0xff]
    %v99 = vld [vmem:[%s3 + $0x28] sm:$0xff]
    %v100 = vld [vmem:[%s3 + $0x30] sm:$0xff]
    %v101 = vld [vmem:[%s3 + $0x38] sm:$0xff]
    %v102 = vld [vmem:[%s3 + $0x40] sm:$0xff]
    %v103 = vld [vmem:[%s3 + $0x48] sm:$0xff]
    %v104 = vld [vmem:[%s3 + $0x50] sm:$0xff]
    %v105 = vld [vmem:[%s3 + $0x58] sm:$0xff]
    %v106 = vld [vmem:[%s3 + $0x60] sm:$0xff]
    %v107 = vld [vmem:[%s3 + $0x68] sm:$0xff]
    %v108 = vld [vmem:[%s3 + $0x70] sm:$0xff]
    %v109 = vld [vmem:[%s3 + $0x78] sm:$0xff]
    %v110 = vld [vmem:[%s3 + $0x80] sm:$0x1]
    %112 = vset.pattern.permute.xlu0 0
    %113 = vperm.xlu0 %112, %v94
    %v114 = vpop.permute.xlu0 %113
    %117 = vset.pattern.permute.xlu0 0
    %118 = vperm.xlu0 %117, %v95
    %v119 = vpop.permute.xlu0 %118
    %122 = vset.pattern.permute.xlu0 0
    %123 = vperm.xlu0 %122, %v96
    %v124 = vpop.permute.xlu0 %123
    %127 = vset.pattern.permute.xlu0 0
    %128 = vperm.xlu0 %127, %v97
    %v129 = vpop.permute.xlu0 %128
    %vm131 = vcmask 130048
    %v133 = vsel %vm131, %v82, 0
    %v136 = vsel %vm131, %v83, 0
    %v139 = vsel %vm131, %v84, 0
    %v142 = vsel %vm131, %v85, 0
    %v145 = vsel %vm131, %v18, 0
    %v148 = vsel %vm131, %v19, 0
    %v151 = vsel %vm131, %v20, 0
    %v154 = vsel %vm131, %v21, 0
    %v157 = vsel %vm131, %v22, 0
    %v160 = vsel %vm131, %v23, 0
    %v163 = vsel %vm131, %v24, 0
    %v166 = vsel %vm131, %v25, 0
    %v169 = vsel %vm131, %v26, 0
    %v172 = vsel %vm131, %v27, 0
    %v175 = vsel %vm131, %v28, 0
    %v178 = vsel %vm131, %v29, 0
    %v181 = vsel %vm131, %v30, 0
    %v184 = vsel %vm131, %v31, 0
    %v187 = vsel %vm131, %v32, 0
    %v190 = vsel %vm131, %v33, 0
    %v193 = vsel %vm131, %v34, 0
    %v196 = vsel %vm131, %v35, 0
    %v199 = vsel %vm131, %v36, 0
    %v202 = vsel %vm131, %v37, 0
    %v205 = vsel %vm131, %v38, 0
    %v208 = vsel %vm131, %v39, 0
    %v211 = vsel %vm131, %v40, 0
    %v214 = vsel %vm131, %v41, 0
    %v217 = vsel %vm131, %v42, 0
    %v220 = vsel %vm131, %v43, 0
    %v223 = vsel %vm131, %v44, 0
    %v226 = vsel %vm131, %v45, 0
    %v229 = vsel %vm131, %v46, 0
    %v232 = vsel %vm131, %v47, 0
    %v235 = vsel %vm131, %v48, 0
    %v238 = vsel %vm131, %v49, 0
    %v241 = vsel %vm131, %v50, 0
    %v244 = vsel %vm131, %v51, 0
    %v247 = vsel %vm131, %v52, 0
    %v250 = vsel %vm131, %v53, 0
    %v253 = vsel %vm131, %v54, 0
    %v256 = vsel %vm131, %v55, 0
    %v259 = vsel %vm131, %v56, 0
    %v262 = vsel %vm131, %v57, 0
    %v265 = vsel %vm131, %v58, 0
    %v268 = vsel %vm131, %v59, 0
    %v271 = vsel %vm131, %v60, 0
    %v274 = vsel %vm131, %v61, 0
    %v277 = vsel %vm131, %v62, 0
    %v280 = vsel %vm131, %v63, 0
    %v283 = vsel %vm131, %v64, 0
    %v286 = vsel %vm131, %v65, 0
    %v289 = vsel %vm131, %v66, 0
    %v292 = vsel %vm131, %v67, 0
    %v295 = vsel %vm131, %v68, 0
    %v298 = vsel %vm131, %v69, 0
    %v301 = vsel %vm131, %v70, 0
    %v304 = vsel %vm131, %v71, 0
    %v307 = vsel %vm131, %v72, 0
    %v310 = vsel %vm131, %v73, 0
    %v313 = vsel %vm131, %v74, 0
    %v316 = vsel %vm131, %v75, 0
    %v319 = vsel %vm131, %v76, 0
    %v322 = vsel %vm131, %v77, 0
    %v325 = vsel %vm131, %v78, 0
    %v328 = vsel %vm131, %v79, 0
    %v331 = vsel %vm131, %v80, 0
    %v334 = vsel %vm131, %v81, 0
    %336 = vmatprep.subr.mxu0 0.0
    %337 = vmatpush1.xpose.msra.mxu0 %v190
    %338 = vmatprep.subr.mxu0 0.0
    %339 = vmatpush1.xpose.msra.mxu0 %v187
    %340 = vmatprep.subr.mxu0 0.0
    %341 = vmatpush1.xpose.msra.mxu0 %v184
    %342 = vmatprep.subr.mxu0 0.0
    %343 = vmatpush1.xpose.msra.mxu0 %v181
    %344 = vmatprep.subr.mxu0 0.0
    %345 = vmatpush1.xpose.msra.mxu0 %v178
    %346 = vmatprep.subr.mxu0 0.0
    %347 = vmatpush1.xpose.msra.mxu0 %v175
    %348 = vmatprep.subr.mxu0 0.0
    %349 = vmatpush1.xpose.msra.mxu0 %v172
    %350 = vmatprep.subr.mxu0 0.0
    %351 = vmatpush1.xpose.msra.mxu0 %v169
    %352 = vmatprep.subr.mxu0 0.0
    %353 = vmatpush1.xpose.msra.mxu0 %v166
    %354 = vmatprep.subr.mxu0 0.0
    %355 = vmatpush1.xpose.msra.mxu0 %v163
    %356 = vmatprep.subr.mxu0 0.0
    %357 = vmatpush1.xpose.msra.mxu0 %v160
    %358 = vmatprep.subr.mxu0 0.0
    %359 = vmatpush1.xpose.msra.mxu0 %v157
    %360 = vmatprep.subr.mxu0 0.0
    %361 = vmatpush1.xpose.msra.mxu0 %v154
    %362 = vmatprep.subr.mxu0 0.0
    %363 = vmatpush1.xpose.msra.mxu0 %v151
    %364 = vmatprep.subr.mxu0 0.0
    %365 = vmatpush1.xpose.msra.mxu0 %v148
    %366 = vmatprep.subr.mxu0 0.0
    %367 = vmatpush1.xpose.msra.mxu0 %v145
    %368 = vmatprep.subr.mxu0 0.0
    %369 = vmatpush2.xpose.msra.mxu0 %v238
    %370 = vmatprep.subr.mxu0 0.0
    %371 = vmatpush2.xpose.msra.mxu0 %v235
    %372 = vmatprep.subr.mxu0 0.0
    %373 = vmatpush2.xpose.msra.mxu0 %v232
    %374 = vmatprep.subr.mxu0 0.0
    %375 = vmatpush2.xpose.msra.mxu0 %v229
    %376 = vmatprep.subr.mxu0 0.0
    %377 = vmatpush2.xpose.msra.mxu0 %v226
    %378 = vmatprep.subr.mxu0 0.0
    %379 = vmatpush2.xpose.msra.mxu0 %v223
    %380 = vmatprep.subr.mxu0 0.0
    %381 = vmatpush2.xpose.msra.mxu0 %v220
    %382 = vmatprep.subr.mxu0 0.0
    %383 = vmatpush2.xpose.msra.mxu0 %v217
    %384 = vmatprep.subr.mxu0 0.0
    %385 = vmatpush2.xpose.msra.mxu0 %v214
    %386 = vmatprep.subr.mxu0 0.0
    %387 = vmatpush2.xpose.msra.mxu0 %v211
    %388 = vmatprep.subr.mxu0 0.0
    %389 = vmatpush2.xpose.msra.mxu0 %v208
    %390 = vmatprep.subr.mxu0 0.0
    %391 = vmatpush2.xpose.msra.mxu0 %v205
    %392 = vmatprep.subr.mxu0 0.0
    %393 = vmatpush2.xpose.msra.mxu0 %v202
    %394 = vmatprep.subr.mxu0 0.0
    %395 = vmatpush2.xpose.msra.mxu0 %v199
    %396 = vmatprep.subr.mxu0 0.0
    %397 = vmatpush2.xpose.msra.mxu0 %v196
    %398 = vmatprep.subr.mxu0 0.0
    %399 = vmatpush2.xpose.msra.mxu0 %v193
    %400 = vmatprep.mubr.f32.mxu0 0.0
    %401 = vmatmul.mubr.f32.gmra.mxu0 %v133
    %v402 = vpop.f32.mrf.mxu0
    %v403 = vadd.f32 %v114, %v402
    %v404 = vpop.f32.mrf.mxu0
    %v405 = vadd.f32 %v114, %v404
    %406 = vmatprep.mubr.f32.mxu0 0.0
    %407 = vmatmul.mubr.f32.gmra.mxu0 %v136
    %v408 = vpop.f32.mrf.mxu0
    %v409 = vadd.f32 %v119, %v408
    %v410 = vpop.f32.mrf.mxu0
    %v411 = vadd.f32 %v119, %v410
    %412 = vmatprep.mubr.f32.mxu0 0.0
    %413 = vmatmul.mubr.f32.gmra.mxu0 %v139
    %v414 = vpop.f32.mrf.mxu0
    %v415 = vadd.f32 %v124, %v414
    %v416 = vpop.f32.mrf.mxu0
    %v417 = vadd.f32 %v124, %v416
    %418 = vmatprep.mubr.f32.mxu0 0.0
    %419 = vmatmul.mubr.f32.gmra.mxu0 %v142
    %v420 = vpop.f32.mrf.mxu0
    %v421 = vadd.f32 %v129, %v420
    %v422 = vpop.f32.mrf.mxu0
    %v423 = vadd.f32 %v129, %v422
    %424 = vdwg.mxu0
    %425 = vmatprep.subr.mxu0 0.0
    %426 = vmatpush1.xpose.msra.mxu0 %v286
    %427 = vmatprep.subr.mxu0 0.0
    %428 = vmatpush1.xpose.msra.mxu0 %v283
    %429 = vmatprep.subr.mxu0 0.0
    %430 = vmatpush1.xpose.msra.mxu0 %v280
    %431 = vmatprep.subr.mxu0 0.0
    %432 = vmatpush1.xpose.msra.mxu0 %v277
    %433 = vmatprep.subr.mxu0 0.0
    %434 = vmatpush1.xpose.msra.mxu0 %v274
    %435 = vmatprep.subr.mxu0 0.0
    %436 = vmatpush1.xpose.msra.mxu0 %v271
    %437 = vmatprep.subr.mxu0 0.0
    %438 = vmatpush1.xpose.msra.mxu0 %v268
    %439 = vmatprep.subr.mxu0 0.0
    %440 = vmatpush1.xpose.msra.mxu0 %v265
    %441 = vmatprep.subr.mxu0 0.0
    %442 = vmatpush1.xpose.msra.mxu0 %v262
    %443 = vmatprep.subr.mxu0 0.0
    %444 = vmatpush1.xpose.msra.mxu0 %v259
    %445 = vmatprep.subr.mxu0 0.0
    %446 = vmatpush1.xpose.msra.mxu0 %v256
    %447 = vmatprep.subr.mxu0 0.0
    %448 = vmatpush1.xpose.msra.mxu0 %v253
    %449 = vmatprep.subr.mxu0 0.0
    %450 = vmatpush1.xpose.msra.mxu0 %v250
    %451 = vmatprep.subr.mxu0 0.0
    %452 = vmatpush1.xpose.msra.mxu0 %v247
    %453 = vmatprep.subr.mxu0 0.0
    %454 = vmatpush1.xpose.msra.mxu0 %v244
    %455 = vmatprep.subr.mxu0 0.0
    %456 = vmatpush1.xpose.msra.mxu0 %v241
    %457 = vmatprep.subr.mxu0 0.0
    %458 = vmatpush2.xpose.msra.mxu0 %v334
    %459 = vmatprep.subr.mxu0 0.0
    %460 = vmatpush2.xpose.msra.mxu0 %v331
    %461 = vmatprep.subr.mxu0 0.0
    %462 = vmatpush2.xpose.msra.mxu0 %v328
    %463 = vmatprep.subr.mxu0 0.0
    %464 = vmatpush2.xpose.msra.mxu0 %v325
    %465 = vmatprep.subr.mxu0 0.0
    %466 = vmatpush2.xpose.msra.mxu0 %v322
    %467 = vmatprep.subr.mxu0 0.0
    %468 = vmatpush2.xpose.msra.mxu0 %v319
    %469 = vmatprep.subr.mxu0 0.0
    %470 = vmatpush2.xpose.msra.mxu0 %v316
    %471 = vmatprep.subr.mxu0 0.0
    %472 = vmatpush2.xpose.msra.mxu0 %v313
    %473 = vmatprep.subr.mxu0 0.0
    %474 = vmatpush2.xpose.msra.mxu0 %v310
    %475 = vmatprep.subr.mxu0 0.0
    %476 = vmatpush2.xpose.msra.mxu0 %v307
    %477 = vmatprep.subr.mxu0 0.0
    %478 = vmatpush2.xpose.msra.mxu0 %v304
    %479 = vmatprep.subr.mxu0 0.0
    %480 = vmatpush2.xpose.msra.mxu0 %v301
    %481 = vmatprep.subr.mxu0 0.0
    %482 = vmatpush2.xpose.msra.mxu0 %v298
    %483 = vmatprep.subr.mxu0 0.0
    %484 = vmatpush2.xpose.msra.mxu0 %v295
    %485 = vmatprep.subr.mxu0 0.0
    %486 = vmatpush2.xpose.msra.mxu0 %v292
    %487 = vmatprep.subr.mxu0 0.0
    %488 = vmatpush2.xpose.msra.mxu0 %v289
    %489 = vmatprep.mubr.f32.mxu0 0.0
    %490 = vmatmul.mubr.f32.gmra.mxu0 %v133
    %v491 = vpop.f32.mrf.mxu0
    %v492 = vadd.f32 %v114, %v491
    %v493 = vpop.f32.mrf.mxu0
    %v494 = vadd.f32 %v114, %v493
    %495 = vmatprep.mubr.f32.mxu0 0.0
    %496 = vmatmul.mubr.f32.gmra.mxu0 %v136
    %v497 = vpop.f32.mrf.mxu0
    %v498 = vadd.f32 %v119, %v497
    %v499 = vpop.f32.mrf.mxu0
    %v500 = vadd.f32 %v119, %v499
    %501 = vmatprep.mubr.f32.mxu0 0.0
    %502 = vmatmul.mubr.f32.gmra.mxu0 %v139
    %v503 = vpop.f32.mrf.mxu0
    %v504 = vadd.f32 %v124, %v503
    %v505 = vpop.f32.mrf.mxu0
    %v506 = vadd.f32 %v124, %v505
    %507 = vmatprep.mubr.f32.mxu0 0.0
    %508 = vmatmul.mubr.f32.gmra.mxu0 %v142
    %v509 = vpop.f32.mrf.mxu0
    %v510 = vadd.f32 %v129, %v509
    %v511 = vpop.f32.mrf.mxu0
    %v512 = vadd.f32 %v129, %v511
    %513 = vdwg.mxu0
    %v514 = vmul.f32 %v403, 0.2
    %v515 = vmul.f32 %v405, 0.2
    %v516 = vmul.f32 %v492, 0.2
    %v517 = vmul.f32 %v494, 0.2
    %v518 = vmul.f32 %v409, 0.2
    %v519 = vmul.f32 %v411, 0.2
    %v520 = vmul.f32 %v498, 0.2
    %v521 = vmul.f32 %v500, 0.2
    %v522 = vmul.f32 %v415, 0.2
    %v523 = vmul.f32 %v417, 0.2
    %v524 = vmul.f32 %v504, 0.2
    %v525 = vmul.f32 %v506, 0.2
    %v526 = vmul.f32 %v421, 0.2
    %v527 = vmul.f32 %v423, 0.2
    %v528 = vmul.f32 %v510, 0.2
    %v529 = vmul.f32 %v512, 0.2
    %v530 = vmax.f32 %v403, %v514
    %v531 = vmax.f32 %v405, %v515
    %v532 = vmax.f32 %v492, %v516
    %v533 = vmax.f32 %v494, %v517
    %v534 = vmax.f32 %v409, %v518
    %v535 = vmax.f32 %v411, %v519
    %v536 = vmax.f32 %v498, %v520
    %v537 = vmax.f32 %v500, %v521
    %v538 = vmax.f32 %v415, %v522
    %v539 = vmax.f32 %v417, %v523
    %v540 = vmax.f32 %v504, %v524
    %v541 = vmax.f32 %v506, %v525
    %v542 = vmax.f32 %v421, %v526
    %v543 = vmax.f32 %v423, %v527
    %v544 = vmax.f32 %v510, %v528
    %v545 = vmax.f32 %v512, %v529
    %547 = vset.pattern.permute.xlu0 0
    %548 = vperm.xlu0 %547, %v98
    %v549 = vpop.permute.xlu0 %548
    %552 = vset.pattern.permute.xlu0 0
    %553 = vperm.xlu0 %552, %v99
    %v554 = vpop.permute.xlu0 %553
    %557 = vset.pattern.permute.xlu0 0
    %558 = vperm.xlu0 %557, %v100
    %v559 = vpop.permute.xlu0 %558
    %562 = vset.pattern.permute.xlu0 0
    %563 = vperm.xlu0 %562, %v101
    %v564 = vpop.permute.xlu0 %563
    %vm566 = vcmask 261120
    %v568 = vsel %vm566, %v86, 0
    %v571 = vsel %vm566, %v87, 0
    %v574 = vsel %vm566, %v88, 0
    %v577 = vsel %vm566, %v89, 0
    %579 = vmatprep.subr.mxu0 0.0
    %580 = vmatpush1.msra.mxu0 0.0
    %581 = vmatprep.subr.mxu0 0.0
    %582 = vmatpush1.msra.mxu0 0.0
    %583 = vmatprep.subr.mxu0 0.0
    %584 = vmatpush1.msra.mxu0 0.0
    %585 = vmatprep.subr.mxu0 0.0
    %586 = vmatpush1.msra.mxu0 0.0
    %587 = vmatprep.subr.mxu0 0.0
    %588 = vmatpush1.msra.mxu0 0.0
    %589 = vmatprep.subr.mxu0 0.0
    %590 = vmatpush1.msra.mxu0 0.0
    %591 = vmatprep.subr.mxu0 0.0
    %592 = vmatpush1.msra.mxu0 0.0
    %593 = vmatprep.subr.mxu0 0.0
    %594 = vmatpush1.msra.mxu0 0.0
    %595 = vmatprep.subr.mxu0 0.0
    %596 = vmatpush1.msra.mxu0 0.0
    %597 = vmatprep.subr.mxu0 0.0
    %598 = vmatpush1.msra.mxu0 0.0
    %599 = vmatprep.subr.mxu0 0.0
    %600 = vmatpush1.msra.mxu0 0.0
    %601 = vmatprep.subr.mxu0 0.0
    %602 = vmatpush1.msra.mxu0 0.0
    %603 = vmatprep.subr.mxu0 %v543
    %604 = vmatpush1.msra.mxu0 %v542
    %605 = vmatprep.subr.mxu0 %v539
    %606 = vmatpush1.msra.mxu0 %v538
    %607 = vmatprep.subr.mxu0 %v535
    %608 = vmatpush1.msra.mxu0 %v534
    %609 = vmatprep.subr.mxu0 %v531
    %610 = vmatpush1.msra.mxu0 %v530
    %611 = vmatprep.subr.mxu0 0.0
    %612 = vmatpush2.msra.mxu0 0.0
    %613 = vmatprep.subr.mxu0 0.0
    %614 = vmatpush2.msra.mxu0 0.0
    %615 = vmatprep.subr.mxu0 0.0
    %616 = vmatpush2.msra.mxu0 0.0
    %617 = vmatprep.subr.mxu0 0.0
    %618 = vmatpush2.msra.mxu0 0.0
    %619 = vmatprep.subr.mxu0 0.0
    %620 = vmatpush2.msra.mxu0 0.0
    %621 = vmatprep.subr.mxu0 0.0
    %622 = vmatpush2.msra.mxu0 0.0
    %623 = vmatprep.subr.mxu0 0.0
    %624 = vmatpush2.msra.mxu0 0.0
    %625 = vmatprep.subr.mxu0 0.0
    %626 = vmatpush2.msra.mxu0 0.0
    %627 = vmatprep.subr.mxu0 0.0
    %628 = vmatpush2.msra.mxu0 0.0
    %629 = vmatprep.subr.mxu0 0.0
    %630 = vmatpush2.msra.mxu0 0.0
    %631 = vmatprep.subr.mxu0 0.0
    %632 = vmatpush2.msra.mxu0 0.0
    %633 = vmatprep.subr.mxu0 0.0
    %634 = vmatpush2.msra.mxu0 0.0
    %635 = vmatprep.subr.mxu0 0.0
    %636 = vmatpush2.msra.mxu0 0.0
    %637 = vmatprep.subr.mxu0 0.0
    %638 = vmatpush2.msra.mxu0 0.0
    %639 = vmatprep.subr.mxu0 0.0
    %640 = vmatpush2.msra.mxu0 0.0
    %641 = vmatprep.subr.mxu0 0.0
    %642 = vmatpush2.msra.mxu0 0.0
    %643 = vmatprep.mubr.f32.mxu0 0.0
    %644 = vmatmul.mubr.f32.gmra.mxu0 %v568
    %v645 = vpop.f32.mrf.mxu0
    %v646 = vadd.f32 %v549, %v645
    %v647 = vpop.f32.mrf.mxu0
    %v648 = vadd.f32 %v549, %v647
    %649 = vmatprep.mubr.f32.mxu0 0.0
    %650 = vmatmul.mubr.f32.gmra.mxu0 %v571
    %v651 = vpop.f32.mrf.mxu0
    %v652 = vadd.f32 %v554, %v651
    %v653 = vpop.f32.mrf.mxu0
    %v654 = vadd.f32 %v554, %v653
    %655 = vmatprep.mubr.f32.mxu0 0.0
    %656 = vmatmul.mubr.f32.gmra.mxu0 %v574
    %v657 = vpop.f32.mrf.mxu0
    %v658 = vadd.f32 %v559, %v657
    %v659 = vpop.f32.mrf.mxu0
    %v660 = vadd.f32 %v559, %v659
    %661 = vmatprep.mubr.f32.mxu0 0.0
    %662 = vmatmul.mubr.f32.gmra.mxu0 %v577
    %v663 = vpop.f32.mrf.mxu0
    %v664 = vadd.f32 %v564, %v663
    %v665 = vpop.f32.mrf.mxu0
    %v666 = vadd.f32 %v564, %v665
    %667 = vdwg.mxu0
    %668 = vmatprep.subr.mxu0 0.0
    %669 = vmatpush1.msra.mxu0 0.0
    %670 = vmatprep.subr.mxu0 0.0
    %671 = vmatpush1.msra.mxu0 0.0
    %672 = vmatprep.subr.mxu0 0.0
    %673 = vmatpush1.msra.mxu0 0.0
    %674 = vmatprep.subr.mxu0 0.0
    %675 = vmatpush1.msra.mxu0 0.0
    %676 = vmatprep.subr.mxu0 0.0
    %677 = vmatpush1.msra.mxu0 0.0
    %678 = vmatprep.subr.mxu0 0.0
    %679 = vmatpush1.msra.mxu0 0.0
    %680 = vmatprep.subr.mxu0 0.0
    %681 = vmatpush1.msra.mxu0 0.0
    %682 = vmatprep.subr.mxu0 0.0
    %683 = vmatpush1.msra.mxu0 0.0
    %684 = vmatprep.subr.mxu0 0.0
    %685 = vmatpush1.msra.mxu0 0.0
    %686 = vmatprep.subr.mxu0 0.0
    %687 = vmatpush1.msra.mxu0 0.0
    %688 = vmatprep.subr.mxu0 0.0
    %689 = vmatpush1.msra.mxu0 0.0
    %690 = vmatprep.subr.mxu0 0.0
    %691 = vmatpush1.msra.mxu0 0.0
    %692 = vmatprep.subr.mxu0 %v545
    %693 = vmatpush1.msra.mxu0 %v544
    %694 = vmatprep.subr.mxu0 %v541
    %695 = vmatpush1.msra.mxu0 %v540
    %696 = vmatprep.subr.mxu0 %v537
    %697 = vmatpush1.msra.mxu0 %v536
    %698 = vmatprep.subr.mxu0 %v533
    %699 = vmatpush1.msra.mxu0 %v532
    %700 = vmatprep.subr.mxu0 0.0
    %701 = vmatpush2.msra.mxu0 0.0
    %702 = vmatprep.subr.mxu0 0.0
    %703 = vmatpush2.msra.mxu0 0.0
    %704 = vmatprep.subr.mxu0 0.0
    %705 = vmatpush2.msra.mxu0 0.0
    %706 = vmatprep.subr.mxu0 0.0
    %707 = vmatpush2.msra.mxu0 0.0
    %708 = vmatprep.subr.mxu0 0.0
    %709 = vmatpush2.msra.mxu0 0.0
    %710 = vmatprep.subr.mxu0 0.0
    %711 = vmatpush2.msra.mxu0 0.0
    %712 = vmatprep.subr.mxu0 0.0
    %713 = vmatpush2.msra.mxu0 0.0
    %714 = vmatprep.subr.mxu0 0.0
    %715 = vmatpush2.msra.mxu0 0.0
    %716 = vmatprep.subr.mxu0 0.0
    %717 = vmatpush2.msra.mxu0 0.0
    %718 = vmatprep.subr.mxu0 0.0
    %719 = vmatpush2.msra.mxu0 0.0
    %720 = vmatprep.subr.mxu0 0.0
    %721 = vmatpush2.msra.mxu0 0.0
    %722 = vmatprep.subr.mxu0 0.0
    %723 = vmatpush2.msra.mxu0 0.0
    %724 = vmatprep.subr.mxu0 0.0
    %725 = vmatpush2.msra.mxu0 0.0
    %726 = vmatprep.subr.mxu0 0.0
    %727 = vmatpush2.msra.mxu0 0.0
    %728 = vmatprep.subr.mxu0 0.0
    %729 = vmatpush2.msra.mxu0 0.0
    %730 = vmatprep.subr.mxu0 0.0
    %731 = vmatpush2.msra.mxu0 0.0
    %732 = vmatprep.mubr.f32.mxu0 0.0
    %733 = vmatmul.mubr.f32.gmra.mxu0 %v568
    %v734 = vpop.f32.mrf.mxu0
    %v735 = vadd.f32 %v549, %v734
    %v736 = vpop.f32.mrf.mxu0
    %v737 = vadd.f32 %v549, %v736
    %738 = vmatprep.mubr.f32.mxu0 0.0
    %739 = vmatmul.mubr.f32.gmra.mxu0 %v571
    %v740 = vpop.f32.mrf.mxu0
    %v741 = vadd.f32 %v554, %v740
    %v742 = vpop.f32.mrf.mxu0
    %v743 = vadd.f32 %v554, %v742
    %744 = vmatprep.mubr.f32.mxu0 0.0
    %745 = vmatmul.mubr.f32.gmra.mxu0 %v574
    %v746 = vpop.f32.mrf.mxu0
    %v747 = vadd.f32 %v559, %v746
    %v748 = vpop.f32.mrf.mxu0
    %v749 = vadd.f32 %v559, %v748
    %750 = vmatprep.mubr.f32.mxu0 0.0
    %751 = vmatmul.mubr.f32.gmra.mxu0 %v577
    %v752 = vpop.f32.mrf.mxu0
    %v753 = vadd.f32 %v564, %v752
    %v754 = vpop.f32.mrf.mxu0
    %v755 = vadd.f32 %v564, %v754
    %756 = vdwg.mxu0
    %v757 = vmul.f32 %v646, 0.2
    %v758 = vmul.f32 %v648, 0.2
    %v759 = vmul.f32 %v735, 0.2
    %v760 = vmul.f32 %v737, 0.2
    %v761 = vmul.f32 %v652, 0.2
    %v762 = vmul.f32 %v654, 0.2
    %v763 = vmul.f32 %v741, 0.2
    %v764 = vmul.f32 %v743, 0.2
    %v765 = vmul.f32 %v658, 0.2
    %v766 = vmul.f32 %v660, 0.2
    %v767 = vmul.f32 %v747, 0.2
    %v768 = vmul.f32 %v749, 0.2
    %v769 = vmul.f32 %v664, 0.2
    %v770 = vmul.f32 %v666, 0.2
    %v771 = vmul.f32 %v753, 0.2
    %v772 = vmul.f32 %v755, 0.2
    %v773 = vmax.f32 %v646, %v757
    %v774 = vmax.f32 %v648, %v758
    %v775 = vmax.f32 %v735, %v759
    %v776 = vmax.f32 %v737, %v760
    %v777 = vmax.f32 %v652, %v761
    %v778 = vmax.f32 %v654, %v762
    %v779 = vmax.f32 %v741, %v763
    %v780 = vmax.f32 %v743, %v764
    %v781 = vmax.f32 %v658, %v765
    %v782 = vmax.f32 %v660, %v766
    %v783 = vmax.f32 %v747, %v767
    %v784 = vmax.f32 %v749, %v768
    %v785 = vmax.f32 %v664, %v769
    %v786 = vmax.f32 %v666, %v770
    %v787 = vmax.f32 %v753, %v771
    %v788 = vmax.f32 %v755, %v772
    %790 = vset.pattern.permute.xlu0 0
    %791 = vperm.xlu0 %790, %v102
    %v792 = vpop.permute.xlu0 %791
    %795 = vset.pattern.permute.xlu0 0
    %796 = vperm.xlu0 %795, %v103
    %v797 = vpop.permute.xlu0 %796
    %800 = vset.pattern.permute.xlu0 0
    %801 = vperm.xlu0 %800, %v104
    %v802 = vpop.permute.xlu0 %801
    %805 = vset.pattern.permute.xlu0 0
    %806 = vperm.xlu0 %805, %v105
    %v807 = vpop.permute.xlu0 %806
    %v810 = vsel %vm566, %v90, 0
    %v813 = vsel %vm566, %v91, 0
    %v816 = vsel %vm566, %v92, 0
    %v819 = vsel %vm566, %v93, 0
    %821 = vmatprep.subr.mxu0 0.0
    %822 = vmatpush1.msra.mxu0 0.0
    %823 = vmatprep.subr.mxu0 0.0
    %824 = vmatpush1.msra.mxu0 0.0
    %825 = vmatprep.subr.mxu0 0.0
    %826 = vmatpush1.msra.mxu0 0.0
    %827 = vmatprep.subr.mxu0 0.0
    %828 = vmatpush1.msra.mxu0 0.0
    %829 = vmatprep.subr.mxu0 0.0
    %830 = vmatpush1.msra.mxu0 0.0
    %831 = vmatprep.subr.mxu0 0.0
    %832 = vmatpush1.msra.mxu0 0.0
    %833 = vmatprep.subr.mxu0 0.0
    %834 = vmatpush1.msra.mxu0 0.0
    %835 = vmatprep.subr.mxu0 0.0
    %836 = vmatpush1.msra.mxu0 0.0
    %837 = vmatprep.subr.mxu0 0.0
    %838 = vmatpush1.msra.mxu0 0.0
    %839 = vmatprep.subr.mxu0 0.0
    %840 = vmatpush1.msra.mxu0 0.0
    %841 = vmatprep.subr.mxu0 0.0
    %842 = vmatpush1.msra.mxu0 0.0
    %843 = vmatprep.subr.mxu0 0.0
    %844 = vmatpush1.msra.mxu0 0.0
    %845 = vmatprep.subr.mxu0 %v786
    %846 = vmatpush1.msra.mxu0 %v785
    %847 = vmatprep.subr.mxu0 %v782
    %848 = vmatpush1.msra.mxu0 %v781
    %849 = vmatprep.subr.mxu0 %v778
    %850 = vmatpush1.msra.mxu0 %v777
    %851 = vmatprep.subr.mxu0 %v774
    %852 = vmatpush1.msra.mxu0 %v773
    %853 = vmatprep.subr.mxu0 0.0
    %854 = vmatpush2.msra.mxu0 0.0
    %855 = vmatprep.subr.mxu0 0.0
    %856 = vmatpush2.msra.mxu0 0.0
    %857 = vmatprep.subr.mxu0 0.0
    %858 = vmatpush2.msra.mxu0 0.0
    %859 = vmatprep.subr.mxu0 0.0
    %860 = vmatpush2.msra.mxu0 0.0
    %861 = vmatprep.subr.mxu0 0.0
    %862 = vmatpush2.msra.mxu0 0.0
    %863 = vmatprep.subr.mxu0 0.0
    %864 = vmatpush2.msra.mxu0 0.0
    %865 = vmatprep.subr.mxu0 0.0
    %866 = vmatpush2.msra.mxu0 0.0
    %867 = vmatprep.subr.mxu0 0.0
    %868 = vmatpush2.msra.mxu0 0.0
    %869 = vmatprep.subr.mxu0 0.0
    %870 = vmatpush2.msra.mxu0 0.0
    %871 = vmatprep.subr.mxu0 0.0
    %872 = vmatpush2.msra.mxu0 0.0
    %873 = vmatprep.subr.mxu0 0.0
    %874 = vmatpush2.msra.mxu0 0.0
    %875 = vmatprep.subr.mxu0 0.0
    %876 = vmatpush2.msra.mxu0 0.0
    %877 = vmatprep.subr.mxu0 0.0
    %878 = vmatpush2.msra.mxu0 0.0
    %879 = vmatprep.subr.mxu0 0.0
    %880 = vmatpush2.msra.mxu0 0.0
    %881 = vmatprep.subr.mxu0 0.0
    %882 = vmatpush2.msra.mxu0 0.0
    %883 = vmatprep.subr.mxu0 0.0
    %884 = vmatpush2.msra.mxu0 0.0
    %885 = vmatprep.mubr.f32.mxu0 0.0
    %886 = vmatmul.mubr.f32.gmra.mxu0 %v810
    %v887 = vpop.f32.mrf.mxu0
    %v888 = vadd.f32 %v792, %v887
    %v889 = vpop.f32.mrf.mxu0
    %v890 = vadd.f32 %v792, %v889
    %891 = vmatprep.mubr.f32.mxu0 0.0
    %892 = vmatmul.mubr.f32.gmra.mxu0 %v813
    %v893 = vpop.f32.mrf.mxu0
    %v894 = vadd.f32 %v797, %v893
    %v895 = vpop.f32.mrf.mxu0
    %v896 = vadd.f32 %v797, %v895
    %897 = vmatprep.mubr.f32.mxu0 0.0
    %898 = vmatmul.mubr.f32.gmra.mxu0 %v816
    %v899 = vpop.f32.mrf.mxu0
    %v900 = vadd.f32 %v802, %v899
    %v901 = vpop.f32.mrf.mxu0
    %v902 = vadd.f32 %v802, %v901
    %903 = vmatprep.mubr.f32.mxu0 0.0
    %904 = vmatmul.mubr.f32.gmra.mxu0 %v819
    %v905 = vpop.f32.mrf.mxu0
    %v906 = vadd.f32 %v807, %v905
    %v907 = vpop.f32.mrf.mxu0
    %v908 = vadd.f32 %v807, %v907
    %909 = vdwg.mxu0
    %910 = vmatprep.subr.mxu0 0.0
    %911 = vmatpush1.msra.mxu0 0.0
    %912 = vmatprep.subr.mxu0 0.0
    %913 = vmatpush1.msra.mxu0 0.0
    %914 = vmatprep.subr.mxu0 0.0
    %915 = vmatpush1.msra.mxu0 0.0
    %916 = vmatprep.subr.mxu0 0.0
    %917 = vmatpush1.msra.mxu0 0.0
    %918 = vmatprep.subr.mxu0 0.0
    %919 = vmatpush1.msra.mxu0 0.0
    %920 = vmatprep.subr.mxu0 0.0
    %921 = vmatpush1.msra.mxu0 0.0
    %922 = vmatprep.subr.mxu0 0.0
    %923 = vmatpush1.msra.mxu0 0.0
    %924 = vmatprep.subr.mxu0 0.0
    %925 = vmatpush1.msra.mxu0 0.0
    %926 = vmatprep.subr.mxu0 0.0
    %927 = vmatpush1.msra.mxu0 0.0
    %928 = vmatprep.subr.mxu0 0.0
    %929 = vmatpush1.msra.mxu0 0.0
    %930 = vmatprep.subr.mxu0 0.0
    %931 = vmatpush1.msra.mxu0 0.0
    %932 = vmatprep.subr.mxu0 0.0
    %933 = vmatpush1.msra.mxu0 0.0
    %934 = vmatprep.subr.mxu0 %v788
    %935 = vmatpush1.msra.mxu0 %v787
    %936 = vmatprep.subr.mxu0 %v784
    %937 = vmatpush1.msra.mxu0 %v783
    %938 = vmatprep.subr.mxu0 %v780
    %939 = vmatpush1.msra.mxu0 %v779
    %940 = vmatprep.subr.mxu0 %v776
    %941 = vmatpush1.msra.mxu0 %v775
    %942 = vmatprep.subr.mxu0 0.0
    %943 = vmatpush2.msra.mxu0 0.0
    %944 = vmatprep.subr.mxu0 0.0
    %945 = vmatpush2.msra.mxu0 0.0
    %946 = vmatprep.subr.mxu0 0.0
    %947 = vmatpush2.msra.mxu0 0.0
    %948 = vmatprep.subr.mxu0 0.0
    %949 = vmatpush2.msra.mxu0 0.0
    %950 = vmatprep.subr.mxu0 0.0
    %951 = vmatpush2.msra.mxu0 0.0
    %952 = vmatprep.subr.mxu0 0.0
    %953 = vmatpush2.msra.mxu0 0.0
    %954 = vmatprep.subr.mxu0 0.0
    %955 = vmatpush2.msra.mxu0 0.0
    %956 = vmatprep.subr.mxu0 0.0
    %957 = vmatpush2.msra.mxu0 0.0
    %958 = vmatprep.subr.mxu0 0.0
    %959 = vmatpush2.msra.mxu0 0.0
    %960 = vmatprep.subr.mxu0 0.0
    %961 = vmatpush2.msra.mxu0 0.0
    %962 = vmatprep.subr.mxu0 0.0
    %963 = vmatpush2.msra.mxu0 0.0
    %964 = vmatprep.subr.mxu0 0.0
    %965 = vmatpush2.msra.mxu0 0.0
    %966 = vmatprep.subr.mxu0 0.0
    %967 = vmatpush2.msra.mxu0 0.0
    %968 = vmatprep.subr.mxu0 0.0
    %969 = vmatpush2.msra.mxu0 0.0
    %970 = vmatprep.subr.mxu0 0.0
    %971 = vmatpush2.msra.mxu0 0.0
    %972 = vmatprep.subr.mxu0 0.0
    %973 = vmatpush2.msra.mxu0 0.0
    %974 = vmatprep.mubr.f32.mxu0 0.0
    %975 = vmatmul.mubr.f32.gmra.mxu0 %v810
    %v976 = vpop.f32.mrf.mxu0
    %v977 = vadd.f32 %v792, %v976
    %v978 = vpop.f32.mrf.mxu0
    %v979 = vadd.f32 %v792, %v978
    %980 = vmatprep.mubr.f32.mxu0 0.0
    %981 = vmatmul.mubr.f32.gmra.mxu0 %v813
    %v982 = vpop.f32.mrf.mxu0
    %v983 = vadd.f32 %v797, %v982
    %v984 = vpop.f32.mrf.mxu0
    %v985 = vadd.f32 %v797, %v984
    %986 = vmatprep.mubr.f32.mxu0 0.0
    %987 = vmatmul.mubr.f32.gmra.mxu0 %v816
    %v988 = vpop.f32.mrf.mxu0
    %v989 = vadd.f32 %v802, %v988
    %v990 = vpop.f32.mrf.mxu0
    %v991 = vadd.f32 %v802, %v990
    %992 = vmatprep.mubr.f32.mxu0 0.0
    %993 = vmatmul.mubr.f32.gmra.mxu0 %v819
    %v994 = vpop.f32.mrf.mxu0
    %v995 = vadd.f32 %v807, %v994
    %v996 = vpop.f32.mrf.mxu0
    %v997 = vadd.f32 %v807, %v996
    %998 = vdwg.mxu0
    %v999 = vmul.f32 %v888, 0.2
    %v1000 = vmul.f32 %v890, 0.2
    %v1001 = vmul.f32 %v977, 0.2
    %v1002 = vmul.f32 %v979, 0.2
    %v1003 = vmul.f32 %v894, 0.2
    %v1004 = vmul.f32 %v896, 0.2
    %v1005 = vmul.f32 %v983, 0.2
    %v1006 = vmul.f32 %v985, 0.2
    %v1007 = vmul.f32 %v900, 0.2
    %v1008 = vmul.f32 %v902, 0.2
    %v1009 = vmul.f32 %v989, 0.2
    %v1010 = vmul.f32 %v991, 0.2
    %v1011 = vmul.f32 %v906, 0.2
    %v1012 = vmul.f32 %v908, 0.2
    %v1013 = vmul.f32 %v995, 0.2
    %v1014 = vmul.f32 %v997, 0.2
    %v1015 = vmax.f32 %v888, %v999
    %v1016 = vmax.f32 %v890, %v1000
    %v1017 = vmax.f32 %v977, %v1001
    %v1018 = vmax.f32 %v979, %v1002
    %v1019 = vmax.f32 %v894, %v1003
    %v1020 = vmax.f32 %v896, %v1004
    %v1021 = vmax.f32 %v983, %v1005
    %v1022 = vmax.f32 %v985, %v1006
    %v1023 = vmax.f32 %v900, %v1007
    %v1024 = vmax.f32 %v902, %v1008
    %v1025 = vmax.f32 %v989, %v1009
    %v1026 = vmax.f32 %v991, %v1010
    %v1027 = vmax.f32 %v906, %v1011
    %v1028 = vmax.f32 %v908, %v1012
    %v1029 = vmax.f32 %v995, %v1013
    %v1030 = vmax.f32 %v997, %v1014
    %1032 = vset.pattern.permute.xlu0 0
    %1033 = vperm.xlu0 %1032, %v106
    %v1034 = vpop.permute.xlu0 %1033
    %1037 = vset.pattern.permute.xlu0 0
    %1038 = vperm.xlu0 %1037, %v107
    %v1039 = vpop.permute.xlu0 %1038
    %1042 = vset.pattern.permute.xlu0 0
    %1043 = vperm.xlu0 %1042, %v108
    %v1044 = vpop.permute.xlu0 %1043
    %1047 = vset.pattern.permute.xlu0 0
    %1048 = vperm.xlu0 %1047, %v109
    %v1049 = vpop.permute.xlu0 %1048
    %v1051 = vmul.f32 %v1015, %v1034
    %v1052 = vmul.f32 %v1016, %v1034
    %v1053 = vmul.f32 %v1017, %v1034
    %v1054 = vmul.f32 %v1018, %v1034
    %v1055 = vmul.f32 %v1019, %v1039
    %v1056 = vmul.f32 %v1020, %v1039
    %v1057 = vmul.f32 %v1021, %v1039
    %v1058 = vmul.f32 %v1022, %v1039
    %v1059 = vmul.f32 %v1023, %v1044
    %v1060 = vmul.f32 %v1024, %v1044
    %v1061 = vmul.f32 %v1025, %v1044
    %v1062 = vmul.f32 %v1026, %v1044
    %v1063 = vmul.f32 %v1027, %v1049
    %v1064 = vmul.f32 %v1028, %v1049
    %v1065 = vmul.f32 %v1029, %v1049
    %v1066 = vmul.f32 %v1030, %v1049
    %v1067 = vadd.f32 %v1051, %v1055
    %v1068 = vadd.f32 %v1067, %v1059
    %v1069 = vadd.f32 %v1068, %v1063
    %v1070 = vrot.slane %v1069, 4
    %v1071 = vadd.f32 %v1069, %v1070
    %v1072 = vrot.slane %v1071, 2
    %v1073 = vadd.f32 %v1071, %v1072
    %v1074 = vrot.slane %v1073, 1
    %v1075 = vadd.f32 %v1073, %v1074
    %v1076 = vadd.f32 %v1052, %v1056
    %v1077 = vadd.f32 %v1076, %v1060
    %v1078 = vadd.f32 %v1077, %v1064
    %v1079 = vrot.slane %v1078, 4
    %v1080 = vadd.f32 %v1078, %v1079
    %v1081 = vrot.slane %v1080, 2
    %v1082 = vadd.f32 %v1080, %v1081
    %v1083 = vrot.slane %v1082, 1
    %v1084 = vadd.f32 %v1082, %v1083
    %v1085 = vadd.f32 %v1053, %v1057
    %v1086 = vadd.f32 %v1085, %v1061
    %v1087 = vadd.f32 %v1086, %v1065
    %v1088 = vrot.slane %v1087, 4
    %v1089 = vadd.f32 %v1087, %v1088
    %v1090 = vrot.slane %v1089, 2
    %v1091 = vadd.f32 %v1089, %v1090
    %v1092 = vrot.slane %v1091, 1
    %v1093 = vadd.f32 %v1091, %v1092
    %v1094 = vadd.f32 %v1054, %v1058
    %v1095 = vadd.f32 %v1094, %v1062
    %v1096 = vadd.f32 %v1095, %v1066
    %v1097 = vrot.slane %v1096, 4
    %v1098 = vadd.f32 %v1096, %v1097
    %v1099 = vrot.slane %v1098, 2
    %v1100 = vadd.f32 %v1098, %v1099
    %v1101 = vrot.slane %v1100, 1
    %v1102 = vadd.f32 %v1100, %v1101
    %1104 = vset.pattern.permute.xlu0 0
    %1105 = vperm.xlu0 %1104, %v110
    %v1106 = vpop.permute.xlu0 %1105
    %v1108 = vadd.f32 %v1075, %v1106
    %v1109 = vadd.f32 %v1084, %v1106
    %v1110 = vadd.f32 %v1093, %v1106
    %v1111 = vadd.f32 %v1102, %v1106
    %v1116 = vcombine.low %v1108, %v1109
    %v1117 = vcombine.low %v1110, %v1111
    %v1119 = vunpack.c.l.s4 1966171168
    %v1120 = vunpack.c.0.s8 %v1119
    %v1121 = vlaneseq
    %v1122 = vshrl.u32 %v1121, 7
    %v1123 = vsub.s32 %v1120, %v1122
    %v1124 = vrot.slane %v1116, %v1123
    %v1126 = vunpack.c.l.s4 1966171168
    %v1127 = vunpack.c.0.s8 %v1126
    %v1128 = vlaneseq
    %v1129 = vshrl.u32 %v1128, 7
    %v1130 = vsub.s32 %v1127, %v1129
    %v1131 = vrot.slane %v1117, %v1130
    %v1132 = vcombine.low %v1124, %v1131
    %v1134 = vunpack.c.l.s4 1966171168
    %v1135 = vunpack.c.0.s8 %v1134
    %v1136 = vlaneseq
    %v1137 = vshrl.u32 %v1136, 7
    %v1138 = vsub.s32 %v1135, %v1137
    %v1139 = vrot.slane %v1132, %v1138
    %v1141 = vlaneseq
    %vm1142 = vcmp.ge.s32.totalorder %v1141, 0
    %vm1143 = vcmp.lt.s32.totalorder %v1141, 512
    %vm1144 = vmand %vm1142, %vm1143
    %1145 = vst.msk [vmem:[#allocation2] sm:$0xf] %vm1144, %v1139
    // Predicated region
    $region18: #{tpu_custom_call.1} parent=1 // pred_check
      _
    $region19: #{tpu_custom_call.1} parent=1 // pred_check_branch
      %1147 = sbr.rel (0) target = $region21
    $region20: #{tpu_custom_call.1} parent=1 // pred_region
      %s1149 = ssub.s32 64, 64
      %1150 = vsyncadd [#allocation3], %s1149
      %s1152 = sshll.u32 [#allocation2], 4
      %s1153 = int_to_ptr.vmem [resolvable:$true] %s1152
      %1155 = dma.vmem_to_hbm [thread:$0]  %s1153, 64, %s4, [#allocation3]
    $region21: #{tpu_custom_call.1} parent=1 // pred_fallthru
      _
    // Predicated region
    $region22: #{tpu_custom_call.1} parent=1 // pred_check
      _
    $region23: #{tpu_custom_call.1} parent=1 // pred_check_branch
      %1157 = sbr.rel (0) target = $region25
    $region24: #{tpu_custom_call.1} parent=1 // pred_region
      %1158 = dma.done [#allocation3], 64
    $region25: #{tpu_custom_call.1} parent=1 // pred_fallthru
      _
    %1159 = vsyncpa [#allocation3], 1

</llo_original>
